<compile_context>
chip_gen: v6e
topology: v6e:2x2x1
jax: 0.10.0
libtpu: 0.0.40
codegen_flags: <defaults>
</compile_context>

<pallas_src>
import jax
import jax.numpy as jnp
from jax import lax
from jax.experimental import pallas as pl
from jax.experimental.pallas import tpu as pltpu


def _pick_tile(dim, preferred=128, align=8):
    """Largest tile <= preferred that divides `dim` and is a multiple of `align`;
    falls back to the full dimension (always a legal BlockSpec size)."""
    if dim % preferred == 0:
        return preferred
    for t in range(min(preferred, dim), 0, -1):
        if t % align == 0 and dim % t == 0:
            return t
    return dim


# --------------------------------------------------------------------------
# kernel 1: per-row inverse-sqrt degree of the binarized adjacency
# --------------------------------------------------------------------------
def _degree_kernel(a_ref, dinv_ref, acc_ref):
    k = pl.program_id(1)

    @pl.when(k == 0)
    def _():
        acc_ref[...] = jnp.zeros_like(acc_ref)

    bin_a = (a_ref[...] != 0).astype(jnp.float32)
    acc_ref[...] += jnp.sum(bin_a, axis=-1, keepdims=True)

    @pl.when(k == pl.num_programs(1) - 1)
    def _():
        # matches torch.pow(D_v, -0.5); zero-degree rows -> inf, as in torch
        dinv_ref[...] = lax.rsqrt(acc_ref[...])


# --------------------------------------------------------------------------
# kernel 2: Hs = dinv * (X @ W.T + b)
# --------------------------------------------------------------------------
def _linear_scale_kernel(x_ref, wt_ref, b_ref, dinv_ref, hs_ref):
    x = x_ref[...].astype(jnp.float32)
    wt = wt_ref[...].astype(jnp.float32)
    h = jnp.dot(x, wt, preferred_element_type=jnp.float32)
    h = (h + b_ref[...].astype(jnp.float32)) * dinv_ref[...]
    hs_ref[...] = h.astype(hs_ref.dtype)


# --------------------------------------------------------------------------
# kernel 3: out = dinv * (bin_A @ Hs)
# --------------------------------------------------------------------------
def _aggregate_kernel(a_ref, hs_ref, dinv_ref, out_ref, acc_ref):
    k = pl.program_id(1)

    @pl.when(k == 0)
    def _():
        acc_ref[...] = jnp.zeros_like(acc_ref)

    bin_a = (a_ref[...] != 0).astype(jnp.float32)
    acc_ref[...] += jnp.dot(bin_a, hs_ref[...].astype(jnp.float32),
                            preferred_element_type=jnp.float32)

    @pl.when(k == pl.num_programs(1) - 1)
    def _():
        out_ref[...] = (acc_ref[...] * dinv_ref[...]).astype(out_ref.dtype)


# --------------------------------------------------------------------------
# wrapper
# --------------------------------------------------------------------------
def rvgcn_forward(X, A, W, b, *, tile_rows=128, tile_k=128):
    """Pallas implementation of RVGCN.forward.

    X: (N, C_in)       node features
    A: (N, N)          (possibly weighted) adjacency; only the nonzero pattern is used
    W: (C_out, C_in)   nn.Linear weight
    b: (C_out,)        nn.Linear bias
    returns: (N, C_out) float32
    """
    N, C_in = X.shape
    C_out = W.shape[0]
    assert A.shape == (N, N)
    assert W.shape == (C_out, C_in) and b.shape == (C_out,)

    TM = _pick_tile(N, tile_rows)   # row tile over nodes
    TK = _pick_tile(N, tile_k)      # reduction tile over neighbor columns

    a_bytes = A.dtype.itemsize
    x_bytes = X.dtype.itemsize
    w_bytes = W.dtype.itemsize

    # ---- kernel 1: dinv (N, 1) ------------------------------------------
    dinv = pl.pallas_call(
        _degree_kernel,
        out_shape=jax.ShapeDtypeStruct((N, 1), jnp.float32),
        grid_spec=pltpu.PrefetchScalarGridSpec(
            num_scalar_prefetch=0,
            grid=(N // TM, N // TK),
            in_specs=[pl.BlockSpec((TM, TK), lambda i, k: (i, k))],
            out_specs=pl.BlockSpec((TM, 1), lambda i, k: (i, 0)),
            scratch_shapes=[pltpu.VMEM((TM, 1), jnp.float32)],
        ),
        compiler_params=pltpu.CompilerParams(
            dimension_semantics=("parallel", "arbitrary")),
        cost_estimate=pl.CostEstimate(
            flops=2 * N * N,
            transcendentals=N,
            bytes_accessed=N * N * a_bytes + N * 4),
    )(A)

    # ---- kernel 2: Hs = dinv * (X @ W.T + b) ----------------------------
    wt = W.T                      # (C_in, C_out): layout glue only (tiny)
    b2d = b.reshape(1, C_out)
    hs = pl.pallas_call(
        _linear_scale_kernel,
        out_shape=jax.ShapeDtypeStruct((N, C_out), jnp.float32),
        grid_spec=pltpu.PrefetchScalarGridSpec(
            num_scalar_prefetch=0,
            grid=(N // TM,),
            in_specs=[
                pl.BlockSpec((TM, C_in), lambda i: (i, 0)),      # X row tile
                pl.BlockSpec((C_in, C_out), lambda i: (0, 0)),   # W.T (resident)
                pl.BlockSpec((1, C_out), lambda i: (0, 0)),      # bias
                pl.BlockSpec((TM, 1), lambda i: (i, 0)),         # dinv row tile
            ],
            out_specs=pl.BlockSpec((TM, C_out), lambda i: (i, 0)),
        ),
        compiler_params=pltpu.CompilerParams(
            dimension_semantics=("parallel",)),
        cost_estimate=pl.CostEstimate(
            flops=2 * N * C_in * C_out + 2 * N * C_out,
            transcendentals=0,
            bytes_accessed=(N * C_in * x_bytes + C_in * C_out * w_bytes
                            + C_out * 4 + N * 4 + N * C_out * 4)),
    )(X, wt, b2d, dinv)

    # ---- kernel 3: out = dinv * (bin_A @ Hs) ----------------------------
    out = pl.pallas_call(
        _aggregate_kernel,
        out_shape=jax.ShapeDtypeStruct((N, C_out), jnp.float32),
        grid_spec=pltpu.PrefetchScalarGridSpec(
            num_scalar_prefetch=0,
            grid=(N // TM, N // TK),
            in_specs=[
                pl.BlockSpec((TM, TK), lambda i, k: (i, k)),     # A tile
                pl.BlockSpec((TK, C_out), lambda i, k: (k, 0)),  # Hs tile
                pl.BlockSpec((TM, 1), lambda i, k: (i, 0)),      # dinv row tile
            ],
            out_specs=pl.BlockSpec((TM, C_out), lambda i, k: (i, 0)),
            scratch_shapes=[pltpu.VMEM((TM, C_out), jnp.float32)],
        ),
        compiler_params=pltpu.CompilerParams(
            dimension_semantics=("parallel", "arbitrary")),
        cost_estimate=pl.CostEstimate(
            flops=2 * N * N * C_out + N * N + N * C_out,
            transcendentals=0,
            bytes_accessed=(N * N * a_bytes + N * C_out * 4
                            + N * 4 + N * C_out * 4)),
    )(A, hs, dinv)

    return out


# --------------------------------------------------------------------------
# plain-JAX reference (mirrors the PyTorch module)
# --------------------------------------------------------------------------
def _reference_forward(X, A, W, b):
    hi = jax.lax.Precision.HIGHEST
    bin_A = jnp.where(A == 0, 0.0, 1.0)
    D_v = jnp.sum(bin_A, axis=1)
    dinv = D_v ** -0.5
    Theta = dinv[:, None] * bin_A * dinv[None, :]
    H = jnp.matmul(X, W.T, precision=hi) + b
    return jnp.matmul(Theta, H, precision=hi)


if __name__ == "__main__":
    # Small GCN-sized problem: 256 nodes, 128 -> 128 channels (lane-aligned).
    N, C_in, C_out = 256, 128, 128

    key = jax.random.PRNGKey(0)
    k_x, k_mask, k_val, k_w, k_b = jax.random.split(key, 5)

    X = jax.random.normal(k_x, (N, C_in), dtype=jnp.float32)

    # Sparse weighted adjacency with guaranteed self-loops so every degree >= 1
    # (torch.pow(D_v, -0.5) would otherwise produce inf, which we also reproduce).
    mask = jax.random.uniform(k_mask, (N, N)) < 0.05
    vals = jax.random.normal(k_val, (N, N), dtype=jnp.float32)
    A = jnp.where(mask, vals, 0.0)
    A = jnp.where(jnp.eye(N, dtype=bool), 1.0, A)

    # nn.Linear(in_channels, out_channels) params; xavier_uniform_ weight,
    # PyTorch-default uniform bias.
    bound_w = (6.0 / (C_in + C_out)) ** 0.5
    W = jax.random.uniform(k_w, (C_out, C_in), jnp.float32, -bound_w, bound_w)
    bound_b = 1.0 / (C_in ** 0.5)
    b = jax.random.uniform(k_b, (C_out,), jnp.float32, -bound_b, bound_b)

    out = rvgcn_forward(X, A, W, b)
    out = jax.block_until_ready(out)

    ref = _reference_forward(X, A, W, b)
    assert out.shape == (N, C_out), out.shape

    # Relative max-error check (tolerant of MXU vs XLA f32 matmul pass counts,
    # strict enough to catch any indexing / normalization bug).
    max_err = float(jnp.max(jnp.abs(out - ref)))
    scale = float(jnp.max(jnp.abs(ref)))
    assert max_err <= 2e-2 * scale + 1e-5, (max_err, scale)

    print("KERNEL_OK")
</pallas_src>

<mosaic_0001>
module attributes {stable_mosaic.version = 11 : i64} {
  func.func @_degree_kernel(%arg0: i32, %arg1: i32, %arg2: memref<128x128xf32, #tpu.memory_space<vmem>>, %arg3: memref<128x1xf32, #tpu.memory_space<vmem>>, %arg4: memref<128x1xf32, #tpu.memory_space<vmem>>) attributes {dimension_semantics = [#tpu.dimension_semantics<parallel>, #tpu.dimension_semantics<arbitrary>], iteration_bounds = array<i64: 2, 2>, scalar_prefetch = 0 : i64, scratch_operands = 1 : i64, tpu.core_type = #tpu.core_type<tc>, window_params = [{transform_indices = @transform_0, window_bounds = array<i64: 128, 128>}, {transform_indices = @transform_1, window_bounds = array<i64: 128, 1>}]} {
    %c0_i32 = arith.constant 0 : i32
    %0 = arith.cmpi eq, %arg1, %c0_i32 : i32
    %1 = arith.extui %0 : i1 to i32
    %c0_i32_0 = arith.constant 0 : i32
    %2 = arith.cmpi ne, %1, %c0_i32_0 : i32
    scf.if %2 {
      %cst_8 = arith.constant 0.000000e+00 : f32
      %16 = vector.broadcast %cst_8 : f32 to vector<128x1xf32>
      %c0_9 = arith.constant 0 : index
      %c0_10 = arith.constant 0 : index
      %17 = vector.load %arg4[%c0_9, %c0_10] : memref<128x1xf32, #tpu.memory_space<vmem>>, vector<128x1xf32>
      tpu.vector_store %arg4[%c0_9, %c0_10], %16 {strides = array<i32>} : memref<128x1xf32, #tpu.memory_space<vmem>>, vector<128x1xf32>,
    } else {
    }
    %c0 = arith.constant 0 : index
    %c0_1 = arith.constant 0 : index
    %3 = vector.load %arg2[%c0, %c0_1] : memref<128x128xf32, #tpu.memory_space<vmem>>, vector<128x128xf32>
    %cst = arith.constant 0.000000e+00 : f32
    %4 = vector.broadcast %cst : f32 to vector<128x128xf32>
    %5 = arith.cmpf one, %3, %4 : vector<128x128xf32>
    %6 = arith.extui %5 : vector<128x128xi1> to vector<128x128xi32>
    %7 = arith.sitofp %6 : vector<128x128xi32> to vector<128x128xf32>
    %c0_2 = arith.constant 0 : index
    %c0_3 = arith.constant 0 : index
    %8 = vector.load %arg4[%c0_2, %c0_3] : memref<128x1xf32, #tpu.memory_space<vmem>>, vector<128x1xf32>
    %cst_4 = arith.constant dense<0.000000e+00> : vector<128xf32>
    %9 = vector.multi_reduction <add>, %7, %cst_4 [1] : vector<128x128xf32> to vector<128xf32>
    %10 = vector.shape_cast %9 : vector<128xf32> to vector<128x1xf32>
    %11 = arith.addf %8, %10 : vector<128x1xf32>
    %c0_5 = arith.constant 0 : index
    %c0_6 = arith.constant 0 : index
    %12 = vector.load %arg4[%c0_5, %c0_6] : memref<128x1xf32, #tpu.memory_space<vmem>>, vector<128x1xf32>
    tpu.vector_store %arg4[%c0_5, %c0_6], %11 {strides = array<i32>} : memref<128x1xf32, #tpu.memory_space<vmem>>, vector<128x1xf32>,
    %c1_i32 = arith.constant 1 : i32
    %13 = arith.cmpi eq, %arg1, %c1_i32 : i32
    %14 = arith.extui %13 : i1 to i32
    %c0_i32_7 = arith.constant 0 : i32
    %15 = arith.cmpi ne, %14, %c0_i32_7 : i32
    scf.if %15 {
      %c0_8 = arith.constant 0 : index
      %c0_9 = arith.constant 0 : index
      %16 = vector.load %arg4[%c0_8, %c0_9] : memref<128x1xf32, #tpu.memory_space<vmem>>, vector<128x1xf32>
      %17 = math.rsqrt %16 : vector<128x1xf32>
      %c0_10 = arith.constant 0 : index
      %c0_11 = arith.constant 0 : index
      %18 = vector.load %arg3[%c0_10, %c0_11] : memref<128x1xf32, #tpu.memory_space<vmem>>, vector<128x1xf32>
      tpu.vector_store %arg3[%c0_10, %c0_11], %17 {strides = array<i32>} : memref<128x1xf32, #tpu.memory_space<vmem>>, vector<128x1xf32>,
    } else {
    }
    return
  }
  func.func @transform_0(%arg0: i32, %arg1: i32) -> (i32, i32) {
    %c0_i32 = arith.constant 0 : i32
    return %arg0, %arg1 : i32, i32
  }
  func.func @transform_1(%arg0: i32, %arg1: i32) -> (i32, i32) {
    %c0_i32 = arith.constant 0 : i32
    %c0_i32_0 = arith.constant 0 : i32
    return %arg0, %c0_i32 : i32, i32
  }
}

</mosaic_0001>

<llo_original>
// kernel: tpu_custom_call.1
$region0: #{tpu_custom_call.1}
  #allocation0 [shape = 'u32[]', space=smem, size = 0x4, offset = 0x4, fixed_abs, tag = 'smem constant byte address 0x4 - core index']
  #allocation1 [shape = 'u32[144,128]{1,0:T(1,128)}', space=vmem, size = 0x12000, scoped, tag = 'internal scratch']
  #allocation2 [shape = 'f32[128,1]{1,0:T(8,128)}', space=vmem, size = 0x10000, scoped, tag = 'scratch operand']
  %s0 = inlined_call_operand.hbm [shape: f32[256,256], index: 0, kind: input, shape index: {}]
  %s1 = inlined_call_operand.vmem [shape: f32[256,1], index: 1, kind: output, shape index: {}]
  %s2 = sld [smem:[#allocation0]]
  $region49: #{tpu_custom_call.1} parent=0
    _
  %s4 = ssub.s32 1, %s2
  %s5 = scalar_select 0, %s4, %s2
  $region1: #{tpu_custom_call.1} parent=0
    #allocation3 [shape = 'u8[131072]{0}', space=vmem, size = 0x20000, scoped, tag = 'input window, operand 0']
    #allocation4 [shape = 's32[2]{0}', space=sflag, size = 0x8, scoped, tag = 'scoped memory for tpu_custom_call.1']
    %6 = vsyncpa [#allocation4], 0
    %s7 = scalar_lea.sflag [#allocation4], 1
    %8 = vsyncpa %s7, 0
    loop: start=0, step=1, limit=6
    $region2: #{tpu_custom_call.1} parent=1 // loop_pre_header
      _
    $region3: #{tpu_custom_call.1} parent=1 // loop_header
      %s10 = sphi 0, %s14
      %p11 = scmp.ge.s32.totalorder %s10, 6
      %s17 = sphi 0, %s29
      %s18 = sphi 0, %s25
      %s19 = sphi 0, %s17
      %s20 = sphi 0, %s18
      %s21 = sphi 0, %s19
      %s22 = sphi 0, %s20
      %s34 = sphi 0, %s36
      %s37 = sphi 0, %s34
      %s38 = sphi 0, %s37
      %s54 = sphi 0, %s38
      %s60 = sphi 0, %s62
      %s63 = sphi 0, %s60
      %s64 = sphi 0, %s63
      %s80 = sphi 0, %s64
    $region4: #{tpu_custom_call.1} parent=1 // loop_header_branch
      %13 = sbr.rel (%p11) target = $region8
    $region5: #{tpu_custom_call.1} parent=1 // loop_body
      %s15 = ssub.s32 %s10, 1
      %s16 = ssub.s32 %s10, 2
      %s23 = sadd.s32 1, %s18
      %p24 = scmp.ge.s32.totalorder %s23, 2
      %s25 = scalar_select %p24, 0, %s23
      %s26 = sadd.s32 1, %s17
      %s27 = scalar_select %p24, %s26, %s17
      %p28 = scmp.ge.s32.totalorder %s27, 2
      %s29 = scalar_select %p28, 0, %s27
      %s30 = ssub.s32 %s17, %s29
      %s31 = ssub.s32 %s18, %s25
      %s32 = sor.u32 %s30, %s31
      %p33 = scmp.eq.s32.totalorder %s32, 0
      %s35 = sadd.s32 %s34, 1
      %s36 = scalar_select %p33, %s34, %s35
      %p39 = pneg %p33
      %p40 = scmp.eq.s32.totalorder %s10, 3
      %p41 = por %p39, %p40
      %p42 = scmp.ne.s32.totalorder %s34, %s37
      %p43 = scmp.eq.s32.totalorder %s10, 0
      %p44 = por %p42, %p43
      %p45 = scmp.ne.s32.totalorder %s34, %s37
      %p46 = scmp.eq.s32.totalorder %s15, 3
      %p47 = por %p45, %p46
      %p48 = scmp.ne.s32.totalorder %s37, %s38
      %p49 = scmp.eq.s32.totalorder %s15, 0
      %p50 = por %p48, %p49
      %p51 = scmp.ne.s32.totalorder %s37, %s38
      %p52 = scmp.eq.s32.totalorder %s16, 3
      %p53 = por %p51, %p52
      %p55 = scmp.ne.s32.totalorder %s38, %s54
      %p56 = scmp.eq.s32.totalorder %s16, 0
      %p57 = por %p55, %p56
      %s58 = ssub.s32 %s17, %s29
      %p59 = scmp.eq.s32.totalorder %s58, 0
      %s61 = sadd.s32 %s60, 1
      %s62 = scalar_select %p59, %s60, %s61
      %p65 = pneg %p59
      %p66 = scmp.eq.s32.totalorder %s10, 3
      %p67 = por %p65, %p66
      %p68 = scmp.ne.s32.totalorder %s60, %s63
      %p69 = scmp.eq.s32.totalorder %s10, 0
      %p70 = por %p68, %p69
      %p71 = scmp.ne.s32.totalorder %s60, %s63
      %p72 = scmp.eq.s32.totalorder %s15, 3
      %p73 = por %p71, %p72
      %p74 = scmp.ne.s32.totalorder %s63, %s64
      %p75 = scmp.eq.s32.totalorder %s15, 0
      %p76 = por %p74, %p75
      %p77 = scmp.ne.s32.totalorder %s63, %s64
      %p78 = scmp.eq.s32.totalorder %s16, 3
      %p79 = por %p77, %p78
      %p81 = scmp.ne.s32.totalorder %s64, %s80
      %p82 = scmp.eq.s32.totalorder %s16, 0
      %p83 = por %p81, %p82
      %p84 = scmp.le.s32.totalorder 1, %s10
      %p85 = scmp.lt.s32.totalorder %s10, 5
      %p86 = pnand %p84, %p85
      %p87 = pneg %p86
      // Predicated region
      $region9: #{tpu_custom_call.1} parent=5 // pred_check
        _
      $region10: #{tpu_custom_call.1} parent=5 // pred_check_branch
        %89 = sbr.rel (%p86) target = $region12
      $region11: #{tpu_custom_call.1} parent=5 // pred_region
        %s90 = ssub.s32 %s10, 1
      $region12: #{tpu_custom_call.1} parent=5 // pred_fallthru
        _
      %p91 = scmp.lt.s32.totalorder %s10, 4
      // Predicated region
      $region13: #{tpu_custom_call.1} parent=5 // pred_check
        %p92 = pneg %p91
      $region14: #{tpu_custom_call.1} parent=5 // pred_check_branch
        %94 = sbr.rel (%p92) target = $region16
      $region15: #{tpu_custom_call.1} parent=5 // pred_region
        // Predicated region
        $region17: #{tpu_custom_call.1} parent=15 // pred_check
          %p95 = pneg %p44
        $region18: #{tpu_custom_call.1} parent=15 // pred_check_branch
          %97 = sbr.rel (%p95) target = $region20
        $region19: #{tpu_custom_call.1} parent=15 // pred_region
          %s98 = sand.u32 %s34, 1
          %s99 = scalar_lea.sflag [#allocation4], %s98
          %s100 = sand.u32 %s34, 1
          %s101 = smul.addr %s100, 128
          %s102 = scalar_lea.vmem [#allocation3], %s101
          %s103 = smul.u32 16, %s17
          %s105 = ssub.s32 2048, 2048
          %106 = vsyncadd %s99, %s105
          %s107 = smul.addr %s103, 2
          %s108 = sadd.s32 %s18, %s107
          %s109 = smul.addr %s108, 128
          %s110 = scalar_lea.hbm %s0, %s109
          %s111 = sshll.u32 %s102, 4
          %s112 = int_to_ptr.vmem [resolvable:$true] %s111
          %117 = dma.hbm_to_vmem [thread:$0]  %s110, 2048, %s112, %s99, 256, 128, 8
        $region20: #{tpu_custom_call.1} parent=15 // pred_fallthru
          _
      $region16: #{tpu_custom_call.1} parent=5 // pred_fallthru
        _
      %p118 = scmp.le.s32.totalorder 1, %s10
      %p119 = scmp.lt.s32.totalorder %s10, 5
      %p120 = pnand %p118, %p119
      %p121 = pneg %p120
      // Predicated region
      $region21: #{tpu_custom_call.1} parent=5 // pred_check
        _
      $region22: #{tpu_custom_call.1} parent=5 // pred_check_branch
        %123 = sbr.rel (%p120) target = $region24
      $region23: #{tpu_custom_call.1} parent=5 // pred_region
        %s124 = ssub.s32 %s10, 1
        %s125 = sand.u32 %s37, 1
        %s126 = scalar_lea.sflag [#allocation4], %s125
        %s127 = sand.u32 %s37, 1
        %s128 = smul.addr %s127, 128
        %s129 = scalar_lea.vmem [#allocation3], %s128
        // Predicated region
        $region25: #{tpu_custom_call.1} parent=23 // pred_check
          %p130 = pneg %p50
        $region26: #{tpu_custom_call.1} parent=23 // pred_check_branch
          %132 = sbr.rel (%p130) target = $region28
        $region27: #{tpu_custom_call.1} parent=23 // pred_region
          %133 = dma.done %s126, 2048
        $region28: #{tpu_custom_call.1} parent=23 // pred_fallthru
          _
        %s134 = sand.u32 %s37, 1
        %s135 = scalar_lea.sflag [#allocation4], %s134
        %s136 = sand.u32 %s37, 1
        %s137 = smul.addr %s136, 128
        %s138 = scalar_lea.vmem [#allocation3], %s137
        %p139 = pneg %p50
        %p140 = pneg %p47
        %p141 = pneg %p76
        %p142 = pneg %p73
        %s143 = smul.u32 16, %s19
        %p144 = scmp.lt.s32.totalorder %s143, 31
        %s145 = scalar_select %p144, %s143, 31
        %s146 = smul.addr %s145, 8
        %s147 = scalar_lea.vmem %s1, %s146
        %s148 = smul.u32 16, %s19
        %s149 = smul.u32 16, %s19
        %p150 = scmp.lt.s32.totalorder %s149, 31
        %s151 = scalar_select %p150, %s149, 31
        %s152 = smul.addr %s151, 8
        %s153 = scalar_lea.vmem %s1, %s152
        %s154 = smul.u32 16, %s19
        %p155 = scmp.eq.s32.totalorder %s20, 0
        // Predicated region
        $region29: #{tpu_custom_call.1} parent=23 // pred_check
          %p156 = pneg %p155
        $region30: #{tpu_custom_call.1} parent=23 // pred_check_branch
          %158 = sbr.rel (%p156) target = $region32
        $region31: #{tpu_custom_call.1} parent=23 // pred_region
          %vm159 = vcmask 7168
          %160 = vst.msk [vmem:[#allocation2] sm:$0xff] %vm159, 0.0
          %161 = vst.msk [vmem:[#allocation2 + $0x8] sm:$0xff] %vm159, 0.0
          %162 = vst.msk [vmem:[#allocation2 + $0x10] sm:$0xff] %vm159, 0.0
          %163 = vst.msk [vmem:[#allocation2 + $0x18] sm:$0xff] %vm159, 0.0
          %164 = vst.msk [vmem:[#allocation2 + $0x20] sm:$0xff] %vm159, 0.0
          %165 = vst.msk [vmem:[#allocation2 + $0x28] sm:$0xff] %vm159, 0.0
          %166 = vst.msk [vmem:[#allocation2 + $0x30] sm:$0xff] %vm159, 0.0
          %167 = vst.msk [vmem:[#allocation2 + $0x38] sm:$0xff] %vm159, 0.0
          %168 = vst.msk [vmem:[#allocation2 + $0x40] sm:$0xff] %vm159, 0.0
          %169 = vst.msk [vmem:[#allocation2 + $0x48] sm:$0xff] %vm159, 0.0
          %170 = vst.msk [vmem:[#allocation2 + $0x50] sm:$0xff] %vm159, 0.0
          %171 = vst.msk [vmem:[#allocation2 + $0x58] sm:$0xff] %vm159, 0.0
          %172 = vst.msk [vmem:[#allocation2 + $0x60] sm:$0xff] %vm159, 0.0
          %173 = vst.msk [vmem:[#allocation2 + $0x68] sm:$0xff] %vm159, 0.0
          %174 = vst.msk [vmem:[#allocation2 + $0x70] sm:$0xff] %vm159, 0.0
          %175 = vst.msk [vmem:[#allocation2 + $0x78] sm:$0xff] %vm159, 0.0
        $region32: #{tpu_custom_call.1} parent=23 // pred_fallthru
          _
        %v176 = vld [vmem:[%s129] sm:$0xff]
        %v177 = vld [vmem:[%s129 + $0x8] sm:$0xff]
        %v178 = vld [vmem:[%s129 + $0x10] sm:$0xff]
        %v179 = vld [vmem:[%s129 + $0x18] sm:$0xff]
        %v180 = vld [vmem:[%s129 + $0x20] sm:$0xff]
        %v181 = vld [vmem:[%s129 + $0x28] sm:$0xff]
        %v182 = vld [vmem:[%s129 + $0x30] sm:$0xff]
        %v183 = vld [vmem:[%s129 + $0x38] sm:$0xff]
        %v184 = vld [vmem:[%s129 + $0x40] sm:$0xff]
        %v185 = vld [vmem:[%s129 + $0x48] sm:$0xff]
        %v186 = vld [vmem:[%s129 + $0x50] sm:$0xff]
        %v187 = vld [vmem:[%s129 + $0x58] sm:$0xff]
        %v188 = vld [vmem:[%s129 + $0x60] sm:$0xff]
        %v189 = vld [vmem:[%s129 + $0x68] sm:$0xff]
        %v190 = vld [vmem:[%s129 + $0x70] sm:$0xff]
        %v191 = vld [vmem:[%s129 + $0x78] sm:$0xff]
        %vm192 = vcmp.ne.f32.partialorder %v176, 0.0
        %vm193 = vcmp.ne.f32.partialorder %v177, 0.0
        %vm194 = vcmp.ne.f32.partialorder %v178, 0.0
        %vm195 = vcmp.ne.f32.partialorder %v179, 0.0
        %vm196 = vcmp.ne.f32.partialorder %v180, 0.0
        %vm197 = vcmp.ne.f32.partialorder %v181, 0.0
        %vm198 = vcmp.ne.f32.partialorder %v182, 0.0
        %vm199 = vcmp.ne.f32.partialorder %v183, 0.0
        %vm200 = vcmp.ne.f32.partialorder %v184, 0.0
        %vm201 = vcmp.ne.f32.partialorder %v185, 0.0
        %vm202 = vcmp.ne.f32.partialorder %v186, 0.0
        %vm203 = vcmp.ne.f32.partialorder %v187, 0.0
        %vm204 = vcmp.ne.f32.partialorder %v188, 0.0
        %vm205 = vcmp.ne.f32.partialorder %v189, 0.0
        %vm206 = vcmp.ne.f32.partialorder %v190, 0.0
        %vm207 = vcmp.ne.f32.partialorder %v191, 0.0
        %v208 = vsel %vm192, 1, 0
        %v209 = vsel %vm193, 1, 0
        %v210 = vsel %vm194, 1, 0
        %v211 = vsel %vm195, 1, 0
        %v212 = vsel %vm196, 1, 0
        %v213 = vsel %vm197, 1, 0
        %v214 = vsel %vm198, 1, 0
        %v215 = vsel %vm199, 1, 0
        %v216 = vsel %vm200, 1, 0
        %v217 = vsel %vm201, 1, 0
        %v218 = vsel %vm202, 1, 0
        %v219 = vsel %vm203, 1, 0
        %v220 = vsel %vm204, 1, 0
        %v221 = vsel %vm205, 1, 0
        %v222 = vsel %vm206, 1, 0
        %v223 = vsel %vm207, 1, 0
        %v224 = vcvt.s32.f32 %v208
        %v225 = vcvt.s32.f32 %v209
        %v226 = vcvt.s32.f32 %v210
        %v227 = vcvt.s32.f32 %v211
        %v228 = vcvt.s32.f32 %v212
        %v229 = vcvt.s32.f32 %v213
        %v230 = vcvt.s32.f32 %v214
        %v231 = vcvt.s32.f32 %v215
        %v232 = vcvt.s32.f32 %v216
        %v233 = vcvt.s32.f32 %v217
        %v234 = vcvt.s32.f32 %v218
        %v235 = vcvt.s32.f32 %v219
        %v236 = vcvt.s32.f32 %v220
        %v237 = vcvt.s32.f32 %v221
        %v238 = vcvt.s32.f32 %v222
        %v239 = vcvt.s32.f32 %v223
        %v240 = vld [vmem:[#allocation2] sm:$0xff]
        %v241 = vld [vmem:[#allocation2 + $0x8] sm:$0xff]
        %v242 = vld [vmem:[#allocation2 + $0x10] sm:$0xff]
        %v243 = vld [vmem:[#allocation2 + $0x18] sm:$0xff]
        %v244 = vld [vmem:[#allocation2 + $0x20] sm:$0xff]
        %v245 = vld [vmem:[#allocation2 + $0x28] sm:$0xff]
        %v246 = vld [vmem:[#allocation2 + $0x30] sm:$0xff]
        %v247 = vld [vmem:[#allocation2 + $0x38] sm:$0xff]
        %v248 = vld [vmem:[#allocation2 + $0x40] sm:$0xff]
        %v249 = vld [vmem:[#allocation2 + $0x48] sm:$0xff]
        %v250 = vld [vmem:[#allocation2 + $0x50] sm:$0xff]
        %v251 = vld [vmem:[#allocation2 + $0x58] sm:$0xff]
        %v252 = vld [vmem:[#allocation2 + $0x60] sm:$0xff]
        %v253 = vld [vmem:[#allocation2 + $0x68] sm:$0xff]
        %v254 = vld [vmem:[#allocation2 + $0x70] sm:$0xff]
        %v255 = vld [vmem:[#allocation2 + $0x78] sm:$0xff]
        %256 = vadd.xlane.f32.xlu0 %v224
        %v257 = vpop.xlane.xlu0 %256
        %258 = vadd.xlane.f32.xlu0 %v225
        %v259 = vpop.xlane.xlu0 %258
        %260 = vadd.xlane.f32.xlu0 %v226
        %v261 = vpop.xlane.xlu0 %260
        %262 = vadd.xlane.f32.xlu0 %v227
        %v263 = vpop.xlane.xlu0 %262
        %264 = vadd.xlane.f32.xlu0 %v228
        %v265 = vpop.xlane.xlu0 %264
        %266 = vadd.xlane.f32.xlu0 %v229
        %v267 = vpop.xlane.xlu0 %266
        %268 = vadd.xlane.f32.xlu0 %v230
        %v269 = vpop.xlane.xlu0 %268
        %270 = vadd.xlane.f32.xlu0 %v231
        %v271 = vpop.xlane.xlu0 %270
        %272 = vadd.xlane.f32.xlu0 %v232
        %v273 = vpop.xlane.xlu0 %272
        %274 = vadd.xlane.f32.xlu0 %v233
        %v275 = vpop.xlane.xlu0 %274
        %276 = vadd.xlane.f32.xlu0 %v234
        %v277 = vpop.xlane.xlu0 %276
        %278 = vadd.xlane.f32.xlu0 %v235
        %v279 = vpop.xlane.xlu0 %278
        %280 = vadd.xlane.f32.xlu0 %v236
        %v281 = vpop.xlane.xlu0 %280
        %282 = vadd.xlane.f32.xlu0 %v237
        %v283 = vpop.xlane.xlu0 %282
        %284 = vadd.xlane.f32.xlu0 %v238
        %v285 = vpop.xlane.xlu0 %284
        %286 = vadd.xlane.f32.xlu0 %v239
        %v287 = vpop.xlane.xlu0 %286
        %v288 = vadd.f32 %v240, %v257
        %v289 = vadd.f32 %v241, %v259
        %v290 = vadd.f32 %v242, %v261
        %v291 = vadd.f32 %v243, %v263
        %v292 = vadd.f32 %v244, %v265
        %v293 = vadd.f32 %v245, %v267
        %v294 = vadd.f32 %v246, %v269
        %v295 = vadd.f32 %v247, %v271
        %v296 = vadd.f32 %v248, %v273
        %v297 = vadd.f32 %v249, %v275
        %v298 = vadd.f32 %v250, %v277
        %v299 = vadd.f32 %v251, %v279
        %v300 = vadd.f32 %v252, %v281
        %v301 = vadd.f32 %v253, %v283
        %v302 = vadd.f32 %v254, %v285
        %v303 = vadd.f32 %v255, %v287
        %vm304 = vcmask 7168
        %305 = vst.msk [vmem:[#allocation2] sm:$0xff] %vm304, %v288
        %306 = vst.msk [vmem:[#allocation2 + $0x8] sm:$0xff] %vm304, %v289
        %307 = vst.msk [vmem:[#allocation2 + $0x10] sm:$0xff] %vm304, %v290
        %308 = vst.msk [vmem:[#allocation2 + $0x18] sm:$0xff] %vm304, %v291
        %309 = vst.msk [vmem:[#allocation2 + $0x20] sm:$0xff] %vm304, %v292
        %310 = vst.msk [vmem:[#allocation2 + $0x28] sm:$0xff] %vm304, %v293
        %311 = vst.msk [vmem:[#allocation2 + $0x30] sm:$0xff] %vm304, %v294
        %312 = vst.msk [vmem:[#allocation2 + $0x38] sm:$0xff] %vm304, %v295
        %313 = vst.msk [vmem:[#allocation2 + $0x40] sm:$0xff] %vm304, %v296
        %314 = vst.msk [vmem:[#allocation2 + $0x48] sm:$0xff] %vm304, %v297
        %315 = vst.msk [vmem:[#allocation2 + $0x50] sm:$0xff] %vm304, %v298
        %316 = vst.msk [vmem:[#allocation2 + $0x58] sm:$0xff] %vm304, %v299
        %317 = vst.msk [vmem:[#allocation2 + $0x60] sm:$0xff] %vm304, %v300
        %318 = vst.msk [vmem:[#allocation2 + $0x68] sm:$0xff] %vm304, %v301
        %319 = vst.msk [vmem:[#allocation2 + $0x70] sm:$0xff] %vm304, %v302
        %320 = vst.msk [vmem:[#allocation2 + $0x78] sm:$0xff] %vm304, %v303
        %p321 = scmp.eq.s32.totalorder %s20, 1
        // Predicated region
        $region33: #{tpu_custom_call.1} parent=23 // pred_check
          %p322 = pneg %p321
        $region34: #{tpu_custom_call.1} parent=23 // pred_check_branch
          %324 = sbr.rel (%p322) target = $region36
        $region35: #{tpu_custom_call.1} parent=23 // pred_region
          %v325 = vld [vmem:[#allocation2] sm:$0xff]
          %v326 = vld [vmem:[#allocation2 + $0x8] sm:$0xff]
          %v327 = vld [vmem:[#allocation2 + $0x10] sm:$0xff]
          %v328 = vld [vmem:[#allocation2 + $0x18] sm:$0xff]
          %v329 = vld [vmem:[#allocation2 + $0x20] sm:$0xff]
          %v330 = vld [vmem:[#allocation2 + $0x28] sm:$0xff]
          %v331 = vld [vmem:[#allocation2 + $0x30] sm:$0xff]
          %v332 = vld [vmem:[#allocation2 + $0x38] sm:$0xff]
          %v333 = vld [vmem:[#allocation2 + $0x40] sm:$0xff]
          %v334 = vld [vmem:[#allocation2 + $0x48] sm:$0xff]
          %v335 = vld [vmem:[#allocation2 + $0x50] sm:$0xff]
          %v336 = vld [vmem:[#allocation2 + $0x58] sm:$0xff]
          %v337 = vld [vmem:[#allocation2 + $0x60] sm:$0xff]
          %v338 = vld [vmem:[#allocation2 + $0x68] sm:$0xff]
          %v339 = vld [vmem:[#allocation2 + $0x70] sm:$0xff]
          %v340 = vld [vmem:[#allocation2 + $0x78] sm:$0xff]
          %v341 = vrsqrt.pop %v325
          %v342 = vrsqrt.pop %v326
          %v343 = vrsqrt.pop %v327
          %v344 = vrsqrt.pop %v328
          %v345 = vrsqrt.pop %v329
          %v346 = vrsqrt.pop %v330
          %v347 = vrsqrt.pop %v331
          %v348 = vrsqrt.pop %v332
          %v349 = vrsqrt.pop %v333
          %v350 = vrsqrt.pop %v334
          %v351 = vrsqrt.pop %v335
          %v352 = vrsqrt.pop %v336
          %v353 = vrsqrt.pop %v337
          %v354 = vrsqrt.pop %v338
          %v355 = vrsqrt.pop %v339
          %v356 = vrsqrt.pop %v340
          %357 = vst.msk [vmem:[%s153] sm:$0xff] %vm304, %v341
          %358 = vst.msk [vmem:[%s153 + $0x8] sm:$0xff] %vm304, %v342
          %359 = vst.msk [vmem:[%s153 + $0x10] sm:$0xff] %vm304, %v343
          %360 = vst.msk [vmem:[%s153 + $0x18] sm:$0xff] %vm304, %v344
          %361 = vst.msk [vmem:[%s153 + $0x20] sm:$0xff] %vm304, %v345
          %362 = vst.msk [vmem:[%s153 + $0x28] sm:$0xff] %vm304, %v346
          %363 = vst.msk [vmem:[%s153 + $0x30] sm:$0xff] %vm304, %v347
          %364 = vst.msk [vmem:[%s153 + $0x38] sm:$0xff] %vm304, %v348
          %365 = vst.msk [vmem:[%s153 + $0x40] sm:$0xff] %vm304, %v349
          %366 = vst.msk [vmem:[%s153 + $0x48] sm:$0xff] %vm304, %v350
          %367 = vst.msk [vmem:[%s153 + $0x50] sm:$0xff] %vm304, %v351
          %368 = vst.msk [vmem:[%s153 + $0x58] sm:$0xff] %vm304, %v352
          %369 = vst.msk [vmem:[%s153 + $0x60] sm:$0xff] %vm304, %v353
          %370 = vst.msk [vmem:[%s153 + $0x68] sm:$0xff] %vm304, %v354
          %371 = vst.msk [vmem:[%s153 + $0x70] sm:$0xff] %vm304, %v355
          %372 = vst.msk [vmem:[%s153 + $0x78] sm:$0xff] %vm304, %v356
        $region36: #{tpu_custom_call.1} parent=23 // pred_fallthru
          _
        %s373 = smul.u32 16, %s19
        %p374 = scmp.lt.s32.totalorder %s373, 31
        %s375 = scalar_select %p374, %s373, 31
        %s376 = smul.addr %s375, 8
        %s377 = scalar_lea.vmem %s1, %s376
        // Predicated region
        $region37: #{tpu_custom_call.1} parent=23 // pred_check
          %p378 = pneg %p73
        $region38: #{tpu_custom_call.1} parent=23 // pred_check_branch
          %380 = sbr.rel (%p378) target = $region40
        $region39: #{tpu_custom_call.1} parent=23 // pred_region
          %s381 = smul.u32 16, %s19
        $region40: #{tpu_custom_call.1} parent=23 // pred_fallthru
          _
      $region24: #{tpu_custom_call.1} parent=5 // pred_fallthru
        _
      %p382 = scmp.le.s32.totalorder 2, %s10
      // Predicated region
      $region41: #{tpu_custom_call.1} parent=5 // pred_check
        %p383 = pneg %p382
      $region42: #{tpu_custom_call.1} parent=5 // pred_check_branch
        %385 = sbr.rel (%p383) target = $region44
      $region43: #{tpu_custom_call.1} parent=5 // pred_region
        %s386 = ssub.s32 %s10, 2
        // Predicated region
        $region45: #{tpu_custom_call.1} parent=43 // pred_check
          %p387 = pneg %p79
        $region46: #{tpu_custom_call.1} parent=43 // pred_check_branch
          %389 = sbr.rel (%p387) target = $region48
        $region47: #{tpu_custom_call.1} parent=43 // pred_region
          %s390 = smul.u32 16, %s21
          %p391 = scmp.lt.s32.totalorder %s390, 31
          %s392 = scalar_select %p391, %s390, 31
          %s393 = smul.addr %s392, 8
          %s394 = scalar_lea.vmem %s1, %s393
        $region48: #{tpu_custom_call.1} parent=43 // pred_fallthru
          _
      $region44: #{tpu_custom_call.1} parent=5 // pred_fallthru
        _
    $region6: #{tpu_custom_call.1} parent=1 // loop_footer
      %s14 = sadd.s32 1, %s10
    $region7: #{tpu_custom_call.1} parent=1 // loop_footer_branch
      %9 = sbr.rel target = $region3
    $region8: #{tpu_custom_call.1} parent=1 // loop_exit
      _
    %395 = vsyncpa [#allocation4], 1
    %s396 = scalar_lea.sflag [#allocation4], 1
    %397 = vsyncpa %s396, 1

</llo_original>
